<compile_context>
chip_gen: v7x
topology: tpu7x:2x2x1
jax: 0.10.0
libtpu: 0.0.40
codegen_flags: <defaults>
</compile_context>

<pallas_src>
import math

import jax
import jax.numpy as jnp
from jax.experimental import pallas as pl
from jax.experimental.pallas import tpu as pltpu


def _round_up(x, m):
    return ((x + m - 1) // m) * m


# ----------------------------------------------------------------------------
# CustomMappingNetwork: z -> concatenated (frequencies, phase_shifts)
# (the "*15 + 30" frequency affine is folded into w3/b3 by the wrapper)
# ----------------------------------------------------------------------------
def _mapping_kernel(z_ref, w0, b0, w1, b1, w2, b2, w3, b3, out_ref):
    def lrelu(h):
        return jnp.where(h > 0.0, h, 0.2 * h)

    h = jnp.dot(z_ref[...], w0[...], preferred_element_type=jnp.float32) + b0[...]
    h = lrelu(h)
    h = jnp.dot(h, w1[...], preferred_element_type=jnp.float32) + b1[...]
    h = lrelu(h)
    h = jnp.dot(h, w2[...], preferred_element_type=jnp.float32) + b2[...]
    h = lrelu(h)
    out_ref[...] = (jnp.dot(h, w3[...], preferred_element_type=jnp.float32)
                    + b3[...]).astype(out_ref.dtype)


def mapping_network_pallas(z, params, hidden_dim):
    B = z.shape[0]
    H = hidden_dim
    args = [z]
    for i in range(4):
        w = params[f"map_w{i}"]
        b = params[f"map_b{i}"]
        if i == 3:
            # Fold "frequencies = frequencies * 15 + 30" into the last layer:
            # only the first 4H output rows are frequencies.
            scale = jnp.concatenate([jnp.full((4 * H,), 15.0, jnp.float32),
                                     jnp.ones((4 * H,), jnp.float32)])
            shift = jnp.concatenate([jnp.full((4 * H,), 30.0, jnp.float32),
                                     jnp.zeros((4 * H,), jnp.float32)])
            w = w * scale[:, None]
            b = b * scale + shift
        args.append(w.T)                 # (in, out): lane-dense RHS
        args.append(b.reshape(1, -1))
    out_dim = params["map_w3"].shape[0]
    return pl.pallas_call(
        _mapping_kernel,
        out_shape=jax.ShapeDtypeStruct((B, out_dim), jnp.float32),
        in_specs=[pl.BlockSpec(memory_space=pltpu.VMEM)] * len(args),
        out_specs=pl.BlockSpec(memory_space=pltpu.VMEM),
    )(*args)


# ----------------------------------------------------------------------------
# Fused per-point SIREN kernel (density trunk + sigma + FiLM color head + rgb)
# ----------------------------------------------------------------------------
def _siren_points_kernel(
    coords_ref, raydir_ref, freq_ref, phase_ref,
    dw0, db0, dw1, db1, dw2, db2, dw3, db3, dw4, db4,
    fw, fb,
    cw0, cb0, cw1, cb1, cw2, cb2,
    cw3d, cw3x, cb3,
    lw, lb,
    out_ref,
):
    x = coords_ref[0]        # (tile, 3)
    d = raydir_ref[0]        # (tile, 3)
    freqs = freq_ref[0]      # (4, Hp)  per-sample FiLM frequencies (already *15+30)
    phases = phase_ref[0]    # (4, Hp)

    def mm(h, w_ref):
        # lane-dense MXU matmul, f32 accumulation; cast activations to the
        # weight dtype (no-op for f32; bf16 when compute_dtype=bf16 on v5e).
        w = w_ref[...]
        return jnp.dot(h.astype(w.dtype), w, preferred_element_type=jnp.float32)

    def fma3(v, w_ref, b_ref):
        # (tile,3) @ (3,Hp) as 3 broadcast VPU FMAs -- a K=3 MXU matmul would
        # burn a full MXU pass for almost no useful work.
        w = w_ref[...]
        return (v[:, 0:1] * w[0:1, :] + v[:, 1:2] * w[1:2, :]
                + v[:, 2:3] * w[2:3, :] + b_ref[...])

    def film(y, idx):
        f = freqs[idx:idx + 1, :]        # (1, Hp) -> broadcast over rows
        p = phases[idx:idx + 1, :]
        return jnp.sin(f * y + p)

    # density trunk: SINLayer x5 (the 30x SIREN scale is folded into W, b)
    h = jnp.sin(fma3(x, dw0, db0))
    h = jnp.sin(mm(h, dw1) + db1[...])
    h = jnp.sin(mm(h, dw2) + db2[...])
    h = jnp.sin(mm(h, dw3) + db3[...])
    h = jnp.sin(mm(h, dw4) + db4[...])

    # final density layer Linear(H, 1) as a lane reduction (avoids an N=1 matmul)
    sigma = jnp.sum(h * fw[...], axis=-1, keepdims=True) + fb[...]

    # color head: 4 FiLM layers; last one takes cat([ray_dirs, h]) -> weight split
    h = film(mm(h, cw0) + cb0[...], 0)
    h = film(mm(h, cw1) + cb1[...], 1)
    h = film(mm(h, cw2) + cb2[...], 2)
    y = fma3(d, cw3d, cb3) + mm(h, cw3x)
    h = film(y, 3)

    rgb = jax.nn.sigmoid(mm(h, lw) + lb[...])

    # single combined output block: rgb in lanes 0..2, sigma in lane 3
    out_ref[0, :, 0:3] = rgb.astype(out_ref.dtype)
    out_ref[0, :, 3:4] = sigma.astype(out_ref.dtype)


def siren_forward_pallas(params, coords, z, ray_directions, *, hidden_dim,
                         tile=1024, point_normalize=None, film_exp_freq=False,
                         compute_dtype=jnp.float32,
                         vmem_limit_bytes=48 * 1024 * 1024):
    """Pallas equivalent of SPATIAL_SIREN_TEMPLATE_DEFERDIR.forward.

    coords:         (B, N, 3) float32
    z:              (B, z_dim) float32
    ray_directions: (B, N, 3) float32
    returns         (B, N, 4) = cat([sigmoid(rgb), sigma], -1)
    """
    B, N, _ = coords.shape
    H = hidden_dim
    Hp = _round_up(H, 128)     # lane-pad the hidden dim (zero pads are inert)

    # --- mapping network -> per-sample FiLM frequencies / phase shifts ---
    fp = mapping_network_pallas(z, params, H)             # (B, 8H); freqs already *15+30
    freqs = fp[:, :4 * H]
    phases = fp[:, 4 * H:]
    if film_exp_freq:
        freqs = jnp.exp(freqs)
    freqs = freqs.reshape(B, 4, H)
    phases = phases.reshape(B, 4, H)
    if Hp != H:
        padw_fp = ((0, 0), (0, 0), (0, Hp - H))
        freqs = jnp.pad(freqs, padw_fp)
        phases = jnp.pad(phases, padw_fp)

    cd = compute_dtype

    def padw(w, rows, cols):
        return jnp.pad(w, ((0, rows - w.shape[0]), (0, cols - w.shape[1])))

    def padb(b, cols):
        b = b.reshape(1, -1)
        return jnp.pad(b, ((0, 0), (0, cols - b.shape[1])))

    # --- density trunk: fold UniformBoxWarp and the SIREN 30x scale into W, b ---
    s_warp = 1.0
    if point_normalize is not None and float(point_normalize) != 2.0:
        s_warp = 2.0 / float(point_normalize)
    dw0 = padw(params["net_w0"].T * (30.0 * s_warp), 3, Hp)   # (3, Hp)  VPU FMA
    db0 = padb(params["net_b0"] * 30.0, Hp)
    dws = [padw(params[f"net_w{i}"].T * 30.0, Hp, Hp).astype(cd) for i in range(1, 5)]
    dbs = [padb(params[f"net_b{i}"] * 30.0, Hp) for i in range(1, 5)]
    fw_row = padw(params["final_w"], 1, Hp)                    # (1, Hp) reduction row
    fb = params["final_b"].reshape(1, 1)

    # --- color head ---
    cws = [padw(params[f"color_w{i}"].T, Hp, Hp).astype(cd) for i in range(3)]
    cbs = [padb(params[f"color_b{i}"], Hp) for i in range(4)]
    w3 = params["color_w3"]                                    # (H, H+3): input = [ray_dirs, x]
    cw3d = padw(w3[:, :3].T, 3, Hp)                            # (3, Hp)  VPU FMA
    cw3x = padw(w3[:, 3:].T, Hp, Hp).astype(cd)                # (Hp, Hp)
    lw = padw(params["rgb_w"].T, Hp, 3).astype(cd)             # (Hp, 3)
    lb = params["rgb_b"].reshape(1, -1)                        # (1, 3)

    weight_args = (dw0, db0, dws[0], dbs[0], dws[1], dbs[1], dws[2], dbs[2],
                   dws[3], dbs[3],
                   fw_row, fb,
                   cws[0], cbs[0], cws[1], cbs[1], cws[2], cbs[2],
                   cw3d, cw3x, cbs[3],
                   lw, lb)

    # --- pad the point axis to a multiple of the tile ---
    tile = min(int(tile), _round_up(N, 8))
    tile = max(8, (tile // 8) * 8)
    n_tiles = pl.cdiv(N, tile)
    n_pad = n_tiles * tile
    if n_pad != N:
        pad = ((0, 0), (0, n_pad - N), (0, 0))
        coords_p = jnp.pad(coords, pad)
        raydir_p = jnp.pad(ray_directions, pad)
    else:
        coords_p, raydir_p = coords, ray_directions

    grid = (B, n_tiles)

    def tiled3(last):
        return pl.BlockSpec((1, tile, last), lambda b, t: (b, t, 0))

    def replicated(shape):
        nd = len(shape)
        return pl.BlockSpec(shape, lambda b, t, _nd=nd: (0,) * _nd)

    in_specs = [tiled3(3), tiled3(3),
                pl.BlockSpec((1, 4, Hp), lambda b, t: (b, 0, 0)),
                pl.BlockSpec((1, 4, Hp), lambda b, t: (b, 0, 0))]
    in_specs += [replicated(a.shape) for a in weight_args]

    out_shape = jax.ShapeDtypeStruct((B, n_pad, 4), jnp.float32)
    out_specs = pl.BlockSpec((1, tile, 4), lambda b, t: (b, t, 0))

    # advisory cost estimate (helps XLA schedule surrounding ops)
    flops_per_pt = 2 * (3 * Hp + 4 * Hp * Hp + Hp + 3 * Hp * Hp
                        + (Hp + 3) * Hp + 3 * Hp)
    cost = pl.CostEstimate(
        flops=int(B * n_pad * flops_per_pt),
        transcendentals=int(B * n_pad * (9 * Hp + 3)),
        bytes_accessed=int(4 * (coords_p.size + raydir_p.size + B * n_pad * 4
                                + freqs.size + phases.size)
                           + sum(a.size * a.dtype.itemsize for a in weight_args)))

    out = pl.pallas_call(
        _siren_points_kernel,
        out_shape=out_shape,
        grid=grid,
        in_specs=in_specs,
        out_specs=out_specs,
        compiler_params=pltpu.CompilerParams(
            dimension_semantics=("parallel", "parallel"),
            vmem_limit_bytes=int(vmem_limit_bytes)),
        cost_estimate=cost,
    )(coords_p, raydir_p, freqs, phases, *weight_args)

    return out[:, :N, :]


# ----------------------------------------------------------------------------
# Parameter init (mirrors the torch init schemes) + pure-JAX reference
# ----------------------------------------------------------------------------
def init_params(key, *, hidden_dim, z_dim, hidden_z_dim):
    H = hidden_dim
    keys = iter(jax.random.split(key, 48))
    p = {}

    def uni(shape, bound):
        return jax.random.uniform(next(keys), shape, jnp.float32, -bound, bound)

    def nrm(shape, std):
        return std * jax.random.normal(next(keys), shape, jnp.float32)

    # density trunk: SINLayer(3,H) + 4x SINLayer(H,H); sine_init / first_layer_sine_init
    dims = [(3, H)] + [(H, H)] * 4
    for i, (fan_in, fan_out) in enumerate(dims):
        wb = (1.0 / fan_in) if i == 0 else math.sqrt(6.0 / fan_in) / 30.0
        p[f"net_w{i}"] = uni((fan_out, fan_in), wb)
        p[f"net_b{i}"] = uni((fan_out,), 1.0 / math.sqrt(fan_in))

    # final density layer Linear(H,1), frequency_init(30)
    p["final_w"] = uni((1, H), math.sqrt(6.0 / H) / 30.0)
    p["final_b"] = uni((1,), 1.0 / math.sqrt(H))

    # color head: FiLM(H,H) x3 + FiLM(H+3,H); frequency_init(25) / first_layer_film_sine_init
    cdims = [(H, H), (H, H), (H, H), (H + 3, H)]
    for i, (fan_in, fan_out) in enumerate(cdims):
        wb = (1.0 / fan_in) if i == 0 else math.sqrt(6.0 / fan_in) / 25.0
        p[f"color_w{i}"] = uni((fan_out, fan_in), wb)
        p[f"color_b{i}"] = uni((fan_out,), 1.0 / math.sqrt(fan_in))

    # color_layer_linear: Linear(H,3), frequency_init(25)
    p["rgb_w"] = uni((3, H), math.sqrt(6.0 / H) / 25.0)
    p["rgb_b"] = uni((3,), 1.0 / math.sqrt(H))

    # mapping network: kaiming_normal(a=0.2, fan_in); last weight * 0.25
    mdims = [(z_dim, hidden_z_dim), (hidden_z_dim, hidden_z_dim),
             (hidden_z_dim, hidden_z_dim), (hidden_z_dim, 2 * 4 * H)]
    for i, (fan_in, fan_out) in enumerate(mdims):
        std = math.sqrt(2.0 / ((1.0 + 0.2 ** 2) * fan_in))
        w = nrm((fan_out, fan_in), std)
        if i == 3:
            w = w * 0.25
        p[f"map_w{i}"] = w
        p[f"map_b{i}"] = uni((fan_out,), 1.0 / math.sqrt(fan_in))

    return p


def siren_forward_ref(params, coords, z, ray_dirs, *, hidden_dim):
    H = hidden_dim
    h = z
    for i in range(4):
        h = h @ params[f"map_w{i}"].T + params[f"map_b{i}"]
        if i < 3:
            h = jnp.where(h > 0.0, h, 0.2 * h)
    freqs = h[:, :4 * H] * 15.0 + 30.0
    phases = h[:, 4 * H:]

    x = coords
    for i in range(5):
        x = jnp.sin(30.0 * (x @ params[f"net_w{i}"].T + params[f"net_b{i}"]))
    sigma = x @ params["final_w"].T + params["final_b"]

    for i in range(4):
        f = freqs[:, i * H:(i + 1) * H][:, None, :]
        p = phases[:, i * H:(i + 1) * H][:, None, :]
        if i == 3:
            x = jnp.concatenate([ray_dirs, x], axis=-1)
        x = jnp.sin(f * (x @ params[f"color_w{i}"].T + params[f"color_b{i}"]) + p)

    rgb = jax.nn.sigmoid(x @ params["rgb_w"].T + params["rgb_b"])
    return jnp.concatenate([rgb, sigma], axis=-1)


if __name__ == "__main__":
    key = jax.random.PRNGKey(0)
    H = 32       # hidden_dim (small test size; real model uses 256)
    Z = 16       # z_dim
    HZ = 32      # hidden_z_dim
    B = 2        # number of latent codes
    N = 256      # points per code
    TILE = 128   # point tile -> grid (B, N // TILE) = (2, 2); default is 1024

    k_p, k_c, k_z, k_d = jax.random.split(key, 4)
    params = init_params(k_p, hidden_dim=H, z_dim=Z, hidden_z_dim=HZ)
    coords = jax.random.uniform(k_c, (B, N, 3), jnp.float32, -1.0, 1.0)
    z = jax.random.normal(k_z, (B, Z), jnp.float32)
    ray_dirs = jax.random.normal(k_d, (B, N, 3), jnp.float32)
    ray_dirs = ray_dirs / jnp.linalg.norm(ray_dirs, axis=-1, keepdims=True)

    out = siren_forward_pallas(params, coords, z, ray_dirs, hidden_dim=H, tile=TILE)
    out = jax.block_until_ready(out)

    ref = siren_forward_ref(params, coords, z, ray_dirs, hidden_dim=H)
    assert out.shape == (B, N, 4), out.shape
    max_err = float(jnp.max(jnp.abs(out - ref)))
    assert jnp.allclose(out, ref, atol=2e-3, rtol=2e-3), f"mismatch vs ref: {max_err}"

    print("KERNEL_OK")
</pallas_src>

<mosaic_0001>
module attributes {stable_mosaic.version = 11 : i64} {
  func.func @_mapping_kernel(%arg0: memref<2x16xf32, #tpu.memory_space<vmem>>, %arg1: memref<16x32xf32, #tpu.memory_space<vmem>>, %arg2: memref<1x32xf32, #tpu.memory_space<vmem>>, %arg3: memref<32x32xf32, #tpu.memory_space<vmem>>, %arg4: memref<1x32xf32, #tpu.memory_space<vmem>>, %arg5: memref<32x32xf32, #tpu.memory_space<vmem>>, %arg6: memref<1x32xf32, #tpu.memory_space<vmem>>, %arg7: memref<32x256xf32, #tpu.memory_space<vmem>>, %arg8: memref<1x256xf32, #tpu.memory_space<vmem>>, %arg9: memref<2x256xf32, #tpu.memory_space<vmem>>) attributes {dimension_semantics = [], scalar_prefetch = 0 : i64, scratch_operands = 0 : i64, tpu.core_type = #tpu.core_type<tc>} {
    %c0 = arith.constant 0 : index
    %c0_0 = arith.constant 0 : index
    %0 = vector.load %arg0[%c0, %c0_0] : memref<2x16xf32, #tpu.memory_space<vmem>>, vector<2x16xf32>
    %c0_1 = arith.constant 0 : index
    %c0_2 = arith.constant 0 : index
    %1 = vector.load %arg1[%c0_1, %c0_2] : memref<16x32xf32, #tpu.memory_space<vmem>>, vector<16x32xf32>
    %cst = arith.constant dense<0.000000e+00> : vector<2x32xf32>
    %2 = tpu.matmul %0, %1, %cst {dimension_numbers = #tpu.dot_dimension_numbers<[1], [0], [0], [1], [0, 0, 1, 1], [], []>} : vector<2x16xf32>, vector<16x32xf32>, vector<2x32xf32> -> vector<2x32xf32>
    %c0_3 = arith.constant 0 : index
    %c0_4 = arith.constant 0 : index
    %3 = vector.load %arg2[%c0_3, %c0_4] : memref<1x32xf32, #tpu.memory_space<vmem>>, vector<1x32xf32>
    %4 = vector.broadcast %3 : vector<1x32xf32> to vector<2x32xf32>
    %5 = arith.addf %2, %4 : vector<2x32xf32>
    %cst_5 = arith.constant 0.000000e+00 : f32
    %6 = vector.broadcast %cst_5 : f32 to vector<2x32xf32>
    %7 = arith.cmpf ogt, %5, %6 : vector<2x32xf32>
    %cst_6 = arith.constant 2.000000e-01 : f32
    %8 = vector.broadcast %cst_6 : f32 to vector<2x32xf32>
    %9 = arith.mulf %8, %5 : vector<2x32xf32>
    %10 = arith.select %7, %5, %9 : vector<2x32xi1>, vector<2x32xf32>
    %c0_7 = arith.constant 0 : index
    %c0_8 = arith.constant 0 : index
    %11 = vector.load %arg3[%c0_7, %c0_8] : memref<32x32xf32, #tpu.memory_space<vmem>>, vector<32x32xf32>
    %cst_9 = arith.constant dense<0.000000e+00> : vector<2x32xf32>
    %12 = tpu.matmul %10, %11, %cst_9 {dimension_numbers = #tpu.dot_dimension_numbers<[1], [0], [0], [1], [0, 0, 1, 1], [], []>} : vector<2x32xf32>, vector<32x32xf32>, vector<2x32xf32> -> vector<2x32xf32>
    %c0_10 = arith.constant 0 : index
    %c0_11 = arith.constant 0 : index
    %13 = vector.load %arg4[%c0_10, %c0_11] : memref<1x32xf32, #tpu.memory_space<vmem>>, vector<1x32xf32>
    %14 = vector.broadcast %13 : vector<1x32xf32> to vector<2x32xf32>
    %15 = arith.addf %12, %14 : vector<2x32xf32>
    %cst_12 = arith.constant 0.000000e+00 : f32
    %16 = vector.broadcast %cst_12 : f32 to vector<2x32xf32>
    %17 = arith.cmpf ogt, %15, %16 : vector<2x32xf32>
    %cst_13 = arith.constant 2.000000e-01 : f32
    %18 = vector.broadcast %cst_13 : f32 to vector<2x32xf32>
    %19 = arith.mulf %18, %15 : vector<2x32xf32>
    %20 = arith.select %17, %15, %19 : vector<2x32xi1>, vector<2x32xf32>
    %c0_14 = arith.constant 0 : index
    %c0_15 = arith.constant 0 : index
    %21 = vector.load %arg5[%c0_14, %c0_15] : memref<32x32xf32, #tpu.memory_space<vmem>>, vector<32x32xf32>
    %cst_16 = arith.constant dense<0.000000e+00> : vector<2x32xf32>
    %22 = tpu.matmul %20, %21, %cst_16 {dimension_numbers = #tpu.dot_dimension_numbers<[1], [0], [0], [1], [0, 0, 1, 1], [], []>} : vector<2x32xf32>, vector<32x32xf32>, vector<2x32xf32> -> vector<2x32xf32>
    %c0_17 = arith.constant 0 : index
    %c0_18 = arith.constant 0 : index
    %23 = vector.load %arg6[%c0_17, %c0_18] : memref<1x32xf32, #tpu.memory_space<vmem>>, vector<1x32xf32>
    %24 = vector.broadcast %23 : vector<1x32xf32> to vector<2x32xf32>
    %25 = arith.addf %22, %24 : vector<2x32xf32>
    %cst_19 = arith.constant 0.000000e+00 : f32
    %26 = vector.broadcast %cst_19 : f32 to vector<2x32xf32>
    %27 = arith.cmpf ogt, %25, %26 : vector<2x32xf32>
    %cst_20 = arith.constant 2.000000e-01 : f32
    %28 = vector.broadcast %cst_20 : f32 to vector<2x32xf32>
    %29 = arith.mulf %28, %25 : vector<2x32xf32>
    %30 = arith.select %27, %25, %29 : vector<2x32xi1>, vector<2x32xf32>
    %c0_21 = arith.constant 0 : index
    %c0_22 = arith.constant 0 : index
    %31 = vector.load %arg7[%c0_21, %c0_22] : memref<32x256xf32, #tpu.memory_space<vmem>>, vector<32x256xf32>
    %cst_23 = arith.constant dense<0.000000e+00> : vector<2x256xf32>
    %32 = tpu.matmul %30, %31, %cst_23 {dimension_numbers = #tpu.dot_dimension_numbers<[1], [0], [0], [1], [0, 0, 1, 1], [], []>} : vector<2x32xf32>, vector<32x256xf32>, vector<2x256xf32> -> vector<2x256xf32>
    %c0_24 = arith.constant 0 : index
    %c0_25 = arith.constant 0 : index
    %33 = vector.load %arg8[%c0_24, %c0_25] : memref<1x256xf32, #tpu.memory_space<vmem>>, vector<1x256xf32>
    %34 = vector.broadcast %33 : vector<1x256xf32> to vector<2x256xf32>
    %35 = arith.addf %32, %34 : vector<2x256xf32>
    %c0_26 = arith.constant 0 : index
    %c0_27 = arith.constant 0 : index
    %36 = vector.load %arg9[%c0_26, %c0_27] : memref<2x256xf32, #tpu.memory_space<vmem>>, vector<2x256xf32>
    tpu.vector_store %arg9[%c0_26, %c0_27], %35 {strides = array<i32>} : memref<2x256xf32, #tpu.memory_space<vmem>>, vector<2x256xf32>,
    return
  }
}

</mosaic_0001>

<llo_original>
// kernel: tpu_custom_call.1
$region0: #{tpu_custom_call.1}
  #allocation0 [shape = 'u32[]', space=smem, size = 0x4, offset = 0x4, fixed_abs, tag = 'smem constant byte address 0x4 - core index']
  #allocation1 [shape = 'u32[144,128]{1,0:T(1,128)}', space=vmem, size = 0x12000, scoped, tag = 'internal scratch']
  %s0 = inlined_call_operand.hbm [shape: f32[2,16], index: 0, kind: input, shape index: {}]
  %s1 = inlined_call_operand.hbm [shape: f32[16,32], index: 1, kind: input, shape index: {}]
  %s2 = inlined_call_operand.vmem [shape: f32[1,32], index: 2, kind: input, shape index: {}]
  %s3 = inlined_call_operand.hbm [shape: f32[32,32], index: 3, kind: input, shape index: {}]
  %s4 = inlined_call_operand.vmem [shape: f32[1,32], index: 4, kind: input, shape index: {}]
  %s5 = inlined_call_operand.hbm [shape: f32[32,32], index: 5, kind: input, shape index: {}]
  %s6 = inlined_call_operand.vmem [shape: f32[1,32], index: 6, kind: input, shape index: {}]
  %s7 = inlined_call_operand.hbm [shape: f32[32,256], index: 7, kind: input, shape index: {}]
  %s8 = inlined_call_operand.vmem [shape: f32[1,256], index: 8, kind: input, shape index: {}]
  %s9 = inlined_call_operand.hbm [shape: f32[2,256], index: 9, kind: output, shape index: {}]
  %s10 = sld [smem:[#allocation0]]
  $region66: #{tpu_custom_call.1} parent=0
    _
  %s12 = ssub.s32 1, %s10
  %s13 = scalar_select 0, %s12, %s10
  $region1: #{tpu_custom_call.1} parent=0
    #allocation2 [shape = 'u8[1024]{0}', space=vmem, size = 0x400, scoped, tag = 'input window, operand 0, single buffered']
    #allocation3 [shape = 's32[1]{0}', space=sflag, size = 0x4, scoped, tag = 'scoped memory for tpu_custom_call.1']
    #allocation4 [shape = 's32[1]{0}', space=sflag, size = 0x4, scoped, tag = 'scoped memory for tpu_custom_call.1']
    #allocation5 [shape = 'u8[8192]{0}', space=vmem, size = 0x2000, scoped, tag = 'input window, operand 1, single buffered']
    #allocation6 [shape = 's32[1]{0}', space=sflag, size = 0x4, scoped, tag = 'scoped memory for tpu_custom_call.1']
    #allocation7 [shape = 'u8[16384]{0}', space=vmem, size = 0x4000, scoped, tag = 'input window, operand 3, single buffered']
    #allocation8 [shape = 'u8[16384]{0}', space=vmem, size = 0x4000, scoped, tag = 'input window, operand 5, single buffered']
    #allocation9 [shape = 's32[1]{0}', space=sflag, size = 0x4, scoped, tag = 'scoped memory for tpu_custom_call.1']
    #allocation10 [shape = 'u8[32768]{0}', space=vmem, size = 0x8000, scoped, tag = 'input window, operand 7, single buffered']
    #allocation11 [shape = 'u8[2048]{0}', space=vmem, size = 0x800, scoped, tag = 'output window, operand 0, single buffered']
    %14 = vsyncpa [#allocation3], 0
    %15 = vsyncpa [#allocation6], 0
    %16 = vsyncpa [#allocation9], 0
    %17 = vsyncpa [#allocation4], 0
    // Predicated region
    $region2: #{tpu_custom_call.1} parent=1 // pred_check
      _
    $region3: #{tpu_custom_call.1} parent=1 // pred_check_branch
      %19 = sbr.rel (0) target = $region5
    $region4: #{tpu_custom_call.1} parent=1 // pred_region
      %s21 = ssub.s32 32, 32
      %22 = vsyncadd [#allocation3], %s21
      %s24 = sshll.u32 [#allocation2], 4
      %s25 = int_to_ptr.vmem [resolvable:$true] %s24
      %27 = dma.hbm_to_vmem [thread:$0]  %s0, 32, %s25, [#allocation3]
    $region5: #{tpu_custom_call.1} parent=1 // pred_fallthru
      _
    // Predicated region
    $region6: #{tpu_custom_call.1} parent=1 // pred_check
      _
    $region7: #{tpu_custom_call.1} parent=1 // pred_check_branch
      %29 = sbr.rel (0) target = $region9
    $region8: #{tpu_custom_call.1} parent=1 // pred_region
      %s31 = ssub.s32 256, 256
      %32 = vsyncadd [#allocation6], %s31
      %s33 = sshll.u32 [#allocation5], 4
      %s34 = int_to_ptr.vmem [resolvable:$true] %s33
      %39 = dma.hbm_to_vmem [thread:$0]  %s1, 256, %s34, [#allocation6], 128, 128, 8
    $region9: #{tpu_custom_call.1} parent=1 // pred_fallthru
      _
    // Predicated region
    $region10: #{tpu_custom_call.1} parent=1 // pred_check
      _
    $region11: #{tpu_custom_call.1} parent=1 // pred_check_branch
      %41 = sbr.rel (0) target = $region13
    $region12: #{tpu_custom_call.1} parent=1 // pred_region
      _
    $region13: #{tpu_custom_call.1} parent=1 // pred_fallthru
      _
    // Predicated region
    $region14: #{tpu_custom_call.1} parent=1 // pred_check
      _
    $region15: #{tpu_custom_call.1} parent=1 // pred_check_branch
      %43 = sbr.rel (0) target = $region17
    $region16: #{tpu_custom_call.1} parent=1 // pred_region
      %s45 = ssub.s32 512, 512
      %46 = vsyncadd [#allocation6], %s45
      %s47 = sshll.u32 [#allocation7], 4
      %s48 = int_to_ptr.vmem [resolvable:$true] %s47
      %53 = dma.hbm_to_vmem [thread:$0]  %s3, 512, %s48, [#allocation6], 128, 128, 8
    $region17: #{tpu_custom_call.1} parent=1 // pred_fallthru
      _
    // Predicated region
    $region18: #{tpu_custom_call.1} parent=1 // pred_check
      _
    $region19: #{tpu_custom_call.1} parent=1 // pred_check_branch
      %55 = sbr.rel (0) target = $region21
    $region20: #{tpu_custom_call.1} parent=1 // pred_region
      _
    $region21: #{tpu_custom_call.1} parent=1 // pred_fallthru
      _
    // Predicated region
    $region22: #{tpu_custom_call.1} parent=1 // pred_check
      _
    $region23: #{tpu_custom_call.1} parent=1 // pred_check_branch
      %57 = sbr.rel (0) target = $region25
    $region24: #{tpu_custom_call.1} parent=1 // pred_region
      %s59 = ssub.s32 512, 512
      %60 = vsyncadd [#allocation9], %s59
      %s61 = sshll.u32 [#allocation8], 4
      %s62 = int_to_ptr.vmem [resolvable:$true] %s61
      %67 = dma.hbm_to_vmem [thread:$0]  %s5, 512, %s62, [#allocation9], 128, 128, 8
    $region25: #{tpu_custom_call.1} parent=1 // pred_fallthru
      _
    // Predicated region
    $region26: #{tpu_custom_call.1} parent=1 // pred_check
      _
    $region27: #{tpu_custom_call.1} parent=1 // pred_check_branch
      %69 = sbr.rel (0) target = $region29
    $region28: #{tpu_custom_call.1} parent=1 // pred_region
      _
    $region29: #{tpu_custom_call.1} parent=1 // pred_fallthru
      _
    // Predicated region
    $region30: #{tpu_custom_call.1} parent=1 // pred_check
      _
    $region31: #{tpu_custom_call.1} parent=1 // pred_check_branch
      %71 = sbr.rel (0) target = $region33
    $region32: #{tpu_custom_call.1} parent=1 // pred_region
      %s73 = ssub.s32 1024, 1024
      %74 = vsyncadd [#allocation9], %s73
      %s75 = sshll.u32 [#allocation10], 4
      %s76 = int_to_ptr.vmem [resolvable:$true] %s75
      %81 = dma.hbm_to_vmem [thread:$0]  %s7, 1024, %s76, [#allocation9], 256, 256, 16
    $region33: #{tpu_custom_call.1} parent=1 // pred_fallthru
      _
    // Predicated region
    $region34: #{tpu_custom_call.1} parent=1 // pred_check
      _
    $region35: #{tpu_custom_call.1} parent=1 // pred_check_branch
      %83 = sbr.rel (0) target = $region37
    $region36: #{tpu_custom_call.1} parent=1 // pred_region
      _
    $region37: #{tpu_custom_call.1} parent=1 // pred_fallthru
      _
    // Predicated region
    $region38: #{tpu_custom_call.1} parent=1 // pred_check
      _
    $region39: #{tpu_custom_call.1} parent=1 // pred_check_branch
      %85 = sbr.rel (0) target = $region41
    $region40: #{tpu_custom_call.1} parent=1 // pred_region
      %86 = dma.done [#allocation3], 32
    $region41: #{tpu_custom_call.1} parent=1 // pred_fallthru
      _
    // Predicated region
    $region42: #{tpu_custom_call.1} parent=1 // pred_check
      _
    $region43: #{tpu_custom_call.1} parent=1 // pred_check_branch
      %88 = sbr.rel (0) target = $region45
    $region44: #{tpu_custom_call.1} parent=1 // pred_region
      %89 = dma.done [#allocation6], 256
    $region45: #{tpu_custom_call.1} parent=1 // pred_fallthru
      _
    // Predicated region
    $region46: #{tpu_custom_call.1} parent=1 // pred_check
      _
    $region47: #{tpu_custom_call.1} parent=1 // pred_check_branch
      %91 = sbr.rel (0) target = $region49
    $region48: #{tpu_custom_call.1} parent=1 // pred_region
      %92 = dma.done [#allocation6], 512
    $region49: #{tpu_custom_call.1} parent=1 // pred_fallthru
      _
    // Predicated region
    $region50: #{tpu_custom_call.1} parent=1 // pred_check
      _
    $region51: #{tpu_custom_call.1} parent=1 // pred_check_branch
      %94 = sbr.rel (0) target = $region53
    $region52: #{tpu_custom_call.1} parent=1 // pred_region
      %95 = dma.done [#allocation9], 512
    $region53: #{tpu_custom_call.1} parent=1 // pred_fallthru
      _
    // Predicated region
    $region54: #{tpu_custom_call.1} parent=1 // pred_check
      _
    $region55: #{tpu_custom_call.1} parent=1 // pred_check_branch
      %97 = sbr.rel (0) target = $region57
    $region56: #{tpu_custom_call.1} parent=1 // pred_region
      %98 = dma.done [#allocation9], 1024
    $region57: #{tpu_custom_call.1} parent=1 // pred_fallthru
      _
    %v99 = vld [vmem:[#allocation2] sm:$0x3]
    %v100 = vld [vmem:[#allocation5] sm:$0xff]
    %v101 = vld [vmem:[#allocation5 + $0x8] sm:$0xff]
    %v102 = vld [vmem:[%s2] sm:$0x1]
    %v104 = vlaneseq
    %v105 = vshrl.u32 %v104, 7
    %v106 = vsub.s32 0, %v105
    %v107 = vrot.slane %v102, %v106
    %vm109 = vcmask 130048
    %v111 = vsel %vm109, %v99, 0
    %113 = vmatprep.subr.mxu0 0.0
    %114 = vmatpush1.msra.mxu0 %v100
    %115 = vmatprep.subr.mxu0 0.0
    %116 = vmatpush1.msra.mxu0 %v101
    %117 = vmatprep.subr.mxu0 0.0
    %118 = vmatpush1.msra.mxu0 0.0
    %119 = vmatprep.subr.mxu0 0.0
    %120 = vmatpush1.msra.mxu0 0.0
    %121 = vmatprep.subr.mxu0 0.0
    %122 = vmatpush1.msra.mxu0 0.0
    %123 = vmatprep.subr.mxu0 0.0
    %124 = vmatpush1.msra.mxu0 0.0
    %125 = vmatprep.subr.mxu0 0.0
    %126 = vmatpush1.msra.mxu0 0.0
    %127 = vmatprep.subr.mxu0 0.0
    %128 = vmatpush1.msra.mxu0 0.0
    %129 = vmatprep.subr.mxu0 0.0
    %130 = vmatpush1.msra.mxu0 0.0
    %131 = vmatprep.subr.mxu0 0.0
    %132 = vmatpush1.msra.mxu0 0.0
    %133 = vmatprep.subr.mxu0 0.0
    %134 = vmatpush1.msra.mxu0 0.0
    %135 = vmatprep.subr.mxu0 0.0
    %136 = vmatpush1.msra.mxu0 0.0
    %137 = vmatprep.subr.mxu0 0.0
    %138 = vmatpush1.msra.mxu0 0.0
    %139 = vmatprep.subr.mxu0 0.0
    %140 = vmatpush1.msra.mxu0 0.0
    %141 = vmatprep.subr.mxu0 0.0
    %142 = vmatpush1.msra.mxu0 0.0
    %143 = vmatprep.subr.mxu0 0.0
    %144 = vmatpush1.msra.mxu0 0.0
    %145 = vmatprep.subr.mxu0 0.0
    %146 = vmatpush1.msra.mxu0 0.0
    %147 = vmatprep.subr.mxu0 0.0
    %148 = vmatpush1.msra.mxu0 0.0
    %149 = vmatprep.subr.mxu0 0.0
    %150 = vmatpush1.msra.mxu0 0.0
    %151 = vmatprep.subr.mxu0 0.0
    %152 = vmatpush1.msra.mxu0 0.0
    %153 = vmatprep.subr.mxu0 0.0
    %154 = vmatpush1.msra.mxu0 0.0
    %155 = vmatprep.subr.mxu0 0.0
    %156 = vmatpush1.msra.mxu0 0.0
    %157 = vmatprep.subr.mxu0 0.0
    %158 = vmatpush1.msra.mxu0 0.0
    %159 = vmatprep.subr.mxu0 0.0
    %160 = vmatpush1.msra.mxu0 0.0
    %161 = vmatprep.subr.mxu0 0.0
    %162 = vmatpush1.msra.mxu0 0.0
    %163 = vmatprep.subr.mxu0 0.0
    %164 = vmatpush1.msra.mxu0 0.0
    %165 = vmatprep.subr.mxu0 0.0
    %166 = vmatpush1.msra.mxu0 0.0
    %167 = vmatprep.subr.mxu0 0.0
    %168 = vmatpush1.msra.mxu0 0.0
    %169 = vmatprep.subr.mxu0 0.0
    %170 = vmatpush1.msra.mxu0 0.0
    %171 = vmatprep.subr.mxu0 0.0
    %172 = vmatpush1.msra.mxu0 0.0
    %173 = vmatprep.subr.mxu0 0.0
    %174 = vmatpush1.msra.mxu0 0.0
    %175 = vmatprep.subr.mxu0 0.0
    %176 = vmatpush1.msra.mxu0 0.0
    %177 = vmatprep.mubr.f32.mxu0 0.0
    %178 = vmatmul.mubr.f32.gmra.mrb[0].mxu0 %v111
    %v179 = vpop.f32.mrb[0].mxu0
    %v180 = vadd.f32 %v107, %v179
    %v181 = vpop.f32.mrb[0].mxu0
    %182 = vdwg.mxu0
    %vm183 = vcmp.gt.f32.partialorder %v180, 0.0
    %v184 = vmul.f32 %v180, 0.2
    %v185 = vsel %vm183, %v180, %v184
    %v186 = vld [vmem:[#allocation7] sm:$0xff]
    %v187 = vld [vmem:[#allocation7 + $0x8] sm:$0xff]
    %v188 = vld [vmem:[#allocation7 + $0x10] sm:$0xff]
    %v189 = vld [vmem:[#allocation7 + $0x18] sm:$0xff]
    %v190 = vld [vmem:[%s4] sm:$0x1]
    %v192 = vlaneseq
    %v193 = vshrl.u32 %v192, 7
    %v194 = vsub.s32 0, %v193
    %v195 = vrot.slane %v190, %v194
    %vm197 = vcmask 261120
    %v199 = vsel %vm197, %v185, 0
    %201 = vmatprep.subr.mxu0 0.0
    %202 = vmatpush1.msra.mxu0 %v186
    %203 = vmatprep.subr.mxu0 0.0
    %204 = vmatpush1.msra.mxu0 %v187
    %205 = vmatprep.subr.mxu0 0.0
    %206 = vmatpush1.msra.mxu0 %v188
    %207 = vmatprep.subr.mxu0 0.0
    %208 = vmatpush1.msra.mxu0 %v189
    %209 = vmatprep.subr.mxu0 0.0
    %210 = vmatpush1.msra.mxu0 0.0
    %211 = vmatprep.subr.mxu0 0.0
    %212 = vmatpush1.msra.mxu0 0.0
    %213 = vmatprep.subr.mxu0 0.0
    %214 = vmatpush1.msra.mxu0 0.0
    %215 = vmatprep.subr.mxu0 0.0
    %216 = vmatpush1.msra.mxu0 0.0
    %217 = vmatprep.subr.mxu0 0.0
    %218 = vmatpush1.msra.mxu0 0.0
    %219 = vmatprep.subr.mxu0 0.0
    %220 = vmatpush1.msra.mxu0 0.0
    %221 = vmatprep.subr.mxu0 0.0
    %222 = vmatpush1.msra.mxu0 0.0
    %223 = vmatprep.subr.mxu0 0.0
    %224 = vmatpush1.msra.mxu0 0.0
    %225 = vmatprep.subr.mxu0 0.0
    %226 = vmatpush1.msra.mxu0 0.0
    %227 = vmatprep.subr.mxu0 0.0
    %228 = vmatpush1.msra.mxu0 0.0
    %229 = vmatprep.subr.mxu0 0.0
    %230 = vmatpush1.msra.mxu0 0.0
    %231 = vmatprep.subr.mxu0 0.0
    %232 = vmatpush1.msra.mxu0 0.0
    %233 = vmatprep.subr.mxu0 0.0
    %234 = vmatpush1.msra.mxu0 0.0
    %235 = vmatprep.subr.mxu0 0.0
    %236 = vmatpush1.msra.mxu0 0.0
    %237 = vmatprep.subr.mxu0 0.0
    %238 = vmatpush1.msra.mxu0 0.0
    %239 = vmatprep.subr.mxu0 0.0
    %240 = vmatpush1.msra.mxu0 0.0
    %241 = vmatprep.subr.mxu0 0.0
    %242 = vmatpush1.msra.mxu0 0.0
    %243 = vmatprep.subr.mxu0 0.0
    %244 = vmatpush1.msra.mxu0 0.0
    %245 = vmatprep.subr.mxu0 0.0
    %246 = vmatpush1.msra.mxu0 0.0
    %247 = vmatprep.subr.mxu0 0.0
    %248 = vmatpush1.msra.mxu0 0.0
    %249 = vmatprep.subr.mxu0 0.0
    %250 = vmatpush1.msra.mxu0 0.0
    %251 = vmatprep.subr.mxu0 0.0
    %252 = vmatpush1.msra.mxu0 0.0
    %253 = vmatprep.subr.mxu0 0.0
    %254 = vmatpush1.msra.mxu0 0.0
    %255 = vmatprep.subr.mxu0 0.0
    %256 = vmatpush1.msra.mxu0 0.0
    %257 = vmatprep.subr.mxu0 0.0
    %258 = vmatpush1.msra.mxu0 0.0
    %259 = vmatprep.subr.mxu0 0.0
    %260 = vmatpush1.msra.mxu0 0.0
    %261 = vmatprep.subr.mxu0 0.0
    %262 = vmatpush1.msra.mxu0 0.0
    %263 = vmatprep.subr.mxu0 0.0
    %264 = vmatpush1.msra.mxu0 0.0
    %265 = vmatprep.mubr.f32.mxu0 0.0
    %266 = vmatmul.mubr.f32.gmra.mrb[0].mxu0 %v199
    %v267 = vpop.f32.mrb[0].mxu0
    %v268 = vadd.f32 %v195, %v267
    %v269 = vpop.f32.mrb[0].mxu0
    %270 = vdwg.mxu0
    %vm271 = vcmp.gt.f32.partialorder %v268, 0.0
    %v272 = vmul.f32 %v268, 0.2
    %v273 = vsel %vm271, %v268, %v272
    %v274 = vld [vmem:[#allocation8] sm:$0xff]
    %v275 = vld [vmem:[#allocation8 + $0x8] sm:$0xff]
    %v276 = vld [vmem:[#allocation8 + $0x10] sm:$0xff]
    %v277 = vld [vmem:[#allocation8 + $0x18] sm:$0xff]
    %v278 = vld [vmem:[%s6] sm:$0x1]
    %v280 = vlaneseq
    %v281 = vshrl.u32 %v280, 7
    %v282 = vsub.s32 0, %v281
    %v283 = vrot.slane %v278, %v282
    %v286 = vsel %vm197, %v273, 0
    %288 = vmatprep.subr.mxu0 0.0
    %289 = vmatpush1.msra.mxu0 %v274
    %290 = vmatprep.subr.mxu0 0.0
    %291 = vmatpush1.msra.mxu0 %v275
    %292 = vmatprep.subr.mxu0 0.0
    %293 = vmatpush1.msra.mxu0 %v276
    %294 = vmatprep.subr.mxu0 0.0
    %295 = vmatpush1.msra.mxu0 %v277
    %296 = vmatprep.subr.mxu0 0.0
    %297 = vmatpush1.msra.mxu0 0.0
    %298 = vmatprep.subr.mxu0 0.0
    %299 = vmatpush1.msra.mxu0 0.0
    %300 = vmatprep.subr.mxu0 0.0
    %301 = vmatpush1.msra.mxu0 0.0
    %302 = vmatprep.subr.mxu0 0.0
    %303 = vmatpush1.msra.mxu0 0.0
    %304 = vmatprep.subr.mxu0 0.0
    %305 = vmatpush1.msra.mxu0 0.0
    %306 = vmatprep.subr.mxu0 0.0
    %307 = vmatpush1.msra.mxu0 0.0
    %308 = vmatprep.subr.mxu0 0.0
    %309 = vmatpush1.msra.mxu0 0.0
    %310 = vmatprep.subr.mxu0 0.0
    %311 = vmatpush1.msra.mxu0 0.0
    %312 = vmatprep.subr.mxu0 0.0
    %313 = vmatpush1.msra.mxu0 0.0
    %314 = vmatprep.subr.mxu0 0.0
    %315 = vmatpush1.msra.mxu0 0.0
    %316 = vmatprep.subr.mxu0 0.0
    %317 = vmatpush1.msra.mxu0 0.0
    %318 = vmatprep.subr.mxu0 0.0
    %319 = vmatpush1.msra.mxu0 0.0
    %320 = vmatprep.subr.mxu0 0.0
    %321 = vmatpush1.msra.mxu0 0.0
    %322 = vmatprep.subr.mxu0 0.0
    %323 = vmatpush1.msra.mxu0 0.0
    %324 = vmatprep.subr.mxu0 0.0
    %325 = vmatpush1.msra.mxu0 0.0
    %326 = vmatprep.subr.mxu0 0.0
    %327 = vmatpush1.msra.mxu0 0.0
    %328 = vmatprep.subr.mxu0 0.0
    %329 = vmatpush1.msra.mxu0 0.0
    %330 = vmatprep.subr.mxu0 0.0
    %331 = vmatpush1.msra.mxu0 0.0
    %332 = vmatprep.subr.mxu0 0.0
    %333 = vmatpush1.msra.mxu0 0.0
    %334 = vmatprep.subr.mxu0 0.0
    %335 = vmatpush1.msra.mxu0 0.0
    %336 = vmatprep.subr.mxu0 0.0
    %337 = vmatpush1.msra.mxu0 0.0
    %338 = vmatprep.subr.mxu0 0.0
    %339 = vmatpush1.msra.mxu0 0.0
    %340 = vmatprep.subr.mxu0 0.0
    %341 = vmatpush1.msra.mxu0 0.0
    %342 = vmatprep.subr.mxu0 0.0
    %343 = vmatpush1.msra.mxu0 0.0
    %344 = vmatprep.subr.mxu0 0.0
    %345 = vmatpush1.msra.mxu0 0.0
    %346 = vmatprep.subr.mxu0 0.0
    %347 = vmatpush1.msra.mxu0 0.0
    %348 = vmatprep.subr.mxu0 0.0
    %349 = vmatpush1.msra.mxu0 0.0
    %350 = vmatprep.subr.mxu0 0.0
    %351 = vmatpush1.msra.mxu0 0.0
    %352 = vmatprep.mubr.f32.mxu0 0.0
    %353 = vmatmul.mubr.f32.gmra.mrb[0].mxu0 %v286
    %v354 = vpop.f32.mrb[0].mxu0
    %v355 = vadd.f32 %v283, %v354
    %v356 = vpop.f32.mrb[0].mxu0
    %357 = vdwg.mxu0
    %vm358 = vcmp.gt.f32.partialorder %v355, 0.0
    %v359 = vmul.f32 %v355, 0.2
    %v360 = vsel %vm358, %v355, %v359
    %v361 = vld [vmem:[#allocation10] sm:$0xff]
    %v362 = vld [vmem:[#allocation10 + $0x8] sm:$0xff]
    %v363 = vld [vmem:[#allocation10 + $0x10] sm:$0xff]
    %v364 = vld [vmem:[#allocation10 + $0x18] sm:$0xff]
    %v365 = vld [vmem:[#allocation10 + $0x20] sm:$0xff]
    %v366 = vld [vmem:[#allocation10 + $0x28] sm:$0xff]
    %v367 = vld [vmem:[#allocation10 + $0x30] sm:$0xff]
    %v368 = vld [vmem:[#allocation10 + $0x38] sm:$0xff]
    %v369 = vld [vmem:[%s8] sm:$0x3]
    %v371 = vlaneseq
    %v372 = vshrl.u32 %v371, 7
    %v373 = vsub.s32 0, %v372
    %v374 = vrot.slane %v369, %v373
    %v375 = vlaneseq
    %v376 = vshrl.u32 %v375, 7
    %v377 = vsub.s32 1, %v376
    %v378 = vrot.slane %v369, %v377
    %v382 = vsel %vm197, %v360, 0
    %384 = vmatprep.subr.mxu0 %v362
    %385 = vmatpush1.msra.mxu0 %v361
    %386 = vmatprep.subr.mxu0 %v364
    %387 = vmatpush1.msra.mxu0 %v363
    %388 = vmatprep.subr.mxu0 %v366
    %389 = vmatpush1.msra.mxu0 %v365
    %390 = vmatprep.subr.mxu0 %v368
    %391 = vmatpush1.msra.mxu0 %v367
    %392 = vmatprep.subr.mxu0 0.0
    %393 = vmatpush1.msra.mxu0 0.0
    %394 = vmatprep.subr.mxu0 0.0
    %395 = vmatpush1.msra.mxu0 0.0
    %396 = vmatprep.subr.mxu0 0.0
    %397 = vmatpush1.msra.mxu0 0.0
    %398 = vmatprep.subr.mxu0 0.0
    %399 = vmatpush1.msra.mxu0 0.0
    %400 = vmatprep.subr.mxu0 0.0
    %401 = vmatpush1.msra.mxu0 0.0
    %402 = vmatprep.subr.mxu0 0.0
    %403 = vmatpush1.msra.mxu0 0.0
    %404 = vmatprep.subr.mxu0 0.0
    %405 = vmatpush1.msra.mxu0 0.0
    %406 = vmatprep.subr.mxu0 0.0
    %407 = vmatpush1.msra.mxu0 0.0
    %408 = vmatprep.subr.mxu0 0.0
    %409 = vmatpush1.msra.mxu0 0.0
    %410 = vmatprep.subr.mxu0 0.0
    %411 = vmatpush1.msra.mxu0 0.0
    %412 = vmatprep.subr.mxu0 0.0
    %413 = vmatpush1.msra.mxu0 0.0
    %414 = vmatprep.subr.mxu0 0.0
    %415 = vmatpush1.msra.mxu0 0.0
    %416 = vmatprep.subr.mxu0 0.0
    %417 = vmatpush1.msra.mxu0 0.0
    %418 = vmatprep.subr.mxu0 0.0
    %419 = vmatpush1.msra.mxu0 0.0
    %420 = vmatprep.subr.mxu0 0.0
    %421 = vmatpush1.msra.mxu0 0.0
    %422 = vmatprep.subr.mxu0 0.0
    %423 = vmatpush1.msra.mxu0 0.0
    %424 = vmatprep.subr.mxu0 0.0
    %425 = vmatpush1.msra.mxu0 0.0
    %426 = vmatprep.subr.mxu0 0.0
    %427 = vmatpush1.msra.mxu0 0.0
    %428 = vmatprep.subr.mxu0 0.0
    %429 = vmatpush1.msra.mxu0 0.0
    %430 = vmatprep.subr.mxu0 0.0
    %431 = vmatpush1.msra.mxu0 0.0
    %432 = vmatprep.subr.mxu0 0.0
    %433 = vmatpush1.msra.mxu0 0.0
    %434 = vmatprep.subr.mxu0 0.0
    %435 = vmatpush1.msra.mxu0 0.0
    %436 = vmatprep.subr.mxu0 0.0
    %437 = vmatpush1.msra.mxu0 0.0
    %438 = vmatprep.subr.mxu0 0.0
    %439 = vmatpush1.msra.mxu0 0.0
    %440 = vmatprep.subr.mxu0 0.0
    %441 = vmatpush1.msra.mxu0 0.0
    %442 = vmatprep.subr.mxu0 0.0
    %443 = vmatpush1.msra.mxu0 0.0
    %444 = vmatprep.subr.mxu0 0.0
    %445 = vmatpush1.msra.mxu0 0.0
    %446 = vmatprep.subr.mxu0 0.0
    %447 = vmatpush1.msra.mxu0 0.0
    %448 = vmatprep.mubr.f32.mxu0 0.0
    %449 = vmatmul.mubr.f32.gmra.mrb[0].mxu0 %v382
    %v450 = vpop.f32.mrb[0].mxu0
    %v451 = vadd.f32 %v374, %v450
    %v452 = vpop.f32.mrb[0].mxu0
    %v453 = vadd.f32 %v378, %v452
    %454 = vdwg.mxu0
    %v457 = vcombine.low %v451, %v453
    %v459 = vunpack.c.l.s4 1983009808
    %v460 = vunpack.c.0.s8 %v459
    %v461 = vlaneseq
    %v462 = vshrl.u32 %v461, 7
    %v463 = vsub.s32 %v460, %v462
    %v464 = vrot.slane %v457, %v463
    %466 = vst [vmem:[#allocation11] sm:$0xf] %v464
    // Predicated region
    $region58: #{tpu_custom_call.1} parent=1 // pred_check
      _
    $region59: #{tpu_custom_call.1} parent=1 // pred_check_branch
      %468 = sbr.rel (0) target = $region61
    $region60: #{tpu_custom_call.1} parent=1 // pred_region
      %s470 = ssub.s32 64, 64
      %471 = vsyncadd [#allocation4], %s470
      %s473 = sshll.u32 [#allocation11], 4
      %s474 = int_to_ptr.vmem [resolvable:$true] %s473
      %476 = dma.vmem_to_hbm [thread:$0]  %s474, 64, %s9, [#allocation4]
    $region61: #{tpu_custom_call.1} parent=1 // pred_fallthru
      _
    // Predicated region
    $region62: #{tpu_custom_call.1} parent=1 // pred_check
      _
    $region63: #{tpu_custom_call.1} parent=1 // pred_check_branch
      %478 = sbr.rel (0) target = $region65
    $region64: #{tpu_custom_call.1} parent=1 // pred_region
      %479 = dma.done [#allocation4], 64
    $region65: #{tpu_custom_call.1} parent=1 // pred_fallthru
      _
    %480 = vsyncpa [#allocation3], 1
    %481 = vsyncpa [#allocation6], 1
    %482 = vsyncpa [#allocation9], 1
    %483 = vsyncpa [#allocation4], 1

</llo_original>
